<compile_context>
chip_gen: v7x
topology: tpu7x:2x2x1
jax: 0.10.0
libtpu: 0.0.40
codegen_flags: <defaults>
</compile_context>

<pallas_src>
import math

import jax
import jax.numpy as jnp
from jax.experimental import pallas as pl
from jax.experimental.pallas import tpu as pltpu


def _concat_encoder_kernel(x_ref, e_ref, o_ref):
    E = x_ref.shape[-1]
    o_ref[:, :E] = x_ref[...]   # dominant lane-dense copy (E ideally 128-aligned)
    o_ref[:, E:] = e_ref[...]   # D-wide tail from the VMEM-resident encoding tile


def _round_up(v, m):
    return ((v + m - 1) // m) * m


def _pick_tile_rows(n_rows, batch, embed, dims_add, itemsize):
    """Row tile: multiple of lcm(B, sublane pack), sized for ~24 MiB 2x-buffered VMEM."""
    pack = max(8, 32 // itemsize)                       # 8 (f32) / 16 (bf16) / 32 (i8)
    step = (batch * pack) // math.gcd(batch, pack)      # block starts land on row % B == 0
    if n_rows <= step:
        return n_rows                                   # single full block (R = S*B is a multiple of B)
    # Lane-padded VMEM bytes per row for the three blocks (x, e tile, out).
    w = (_round_up(embed, 128) + _round_up(dims_add, 128)
         + _round_up(embed + dims_add, 128)) * itemsize
    budget = 24 * 1024 * 1024                           # double-buffered working-set target
    tile = max(step, (budget // (2 * w)) // step * step)
    # Keep >= 2 grid steps so the "parallel" row axis shards across v7x's 2 TCs.
    half = (n_rows + 2 * step - 1) // (2 * step) * step
    return min(tile, half)


class ConcatenationEncoderPallas:
    """Pallas port of ConcatenationEncoder (eval mode: dropout is identity)."""

    def __init__(self, dims_add: int, dropout: float = 0.1, max_val: float = 200.0):
        self.dims_add = dims_add
        # Deterministic "buffer" (same formula as the torch module's div_term).
        self.div_term = jnp.exp(
            jnp.arange(0, dims_add, 2, dtype=jnp.float32)
            * (-math.log(float(2 * max_val)) / dims_add)
        )
        # TODO(synk): training-mode stochastic dropout not implemented (identity at eval).

    def __call__(self, x: jax.Array, val: jax.Array) -> jax.Array:
        S, B, E = x.shape
        D = self.dims_add
        R = S * B
        itemsize = jnp.dtype(x.dtype).itemsize
        tile_r = _pick_tile_rows(R, B, E, D, itemsize)   # always a multiple of B

        # Hoisted encoding: phase in float32 for accuracy, cast only the final table.
        arg = val.astype(jnp.float32).reshape(B, 1) * self.div_term        # [B, H]
        e = jnp.concatenate([jnp.sin(arg), jnp.cos(jnp.cos(arg))], axis=-1)[:, :D]
        # One row-tile worth of the encoding (rows cycle b = r % B); tiny [tile_r, D].
        e_tile = jnp.tile(e, (tile_r // B, 1)).astype(x.dtype)

        x2 = x.reshape(R, E)                                               # [S*B, E]
        grid = (pl.cdiv(R, tile_r),)
        bytes_accessed = R * (2 * E + D) * itemsize + tile_r * D * itemsize

        out2 = pl.pallas_call(
            _concat_encoder_kernel,
            out_shape=jax.ShapeDtypeStruct((R, E + D), x.dtype),
            grid=grid,
            in_specs=[
                pl.BlockSpec((tile_r, E), lambda i: (i, 0)),
                pl.BlockSpec((tile_r, D), lambda i: (0, 0)),   # constant: fetched once, VMEM-resident
            ],
            out_specs=pl.BlockSpec((tile_r, E + D), lambda i: (i, 0)),
            compiler_params=pltpu.CompilerParams(
                dimension_semantics=("parallel",),   # shard row axis across TCs (v7x)
                vmem_limit_bytes=32 * 1024 * 1024,
            ),
            cost_estimate=pl.CostEstimate(
                flops=0, transcendentals=0, bytes_accessed=bytes_accessed),
        )(x2, e_tile)
        return out2.reshape(S, B, E + D)


def _reference(x, val, div_term, dims_add):
    arg = val.astype(jnp.float32) * div_term
    e_sin = jnp.sin(arg)
    e_cos = jnp.cos(jnp.cos(arg))
    e = jnp.concatenate([e_sin, e_cos], axis=-1)[..., :dims_add].astype(x.dtype)
    e = jnp.broadcast_to(e[None], (x.shape[0],) + e.shape)
    return jnp.concatenate([x, e], axis=-1)


if __name__ == "__main__":
    S, B, E = 8, 2, 128       # seq len, batch, embed dim (E lane-aligned fast path)
    D = 10                    # dims_add
    key = jax.random.PRNGKey(0)
    kx, kv = jax.random.split(key)
    x = jax.random.normal(kx, (S, B, E), dtype=jnp.float32)
    val = jnp.array([[7.0], [4.0]], dtype=jnp.float32)    # [B, 1]

    enc = ConcatenationEncoderPallas(dims_add=D, dropout=0.0, max_val=10.0)
    out = jax.block_until_ready(enc(x, val))

    ref = _reference(x, val, enc.div_term, D)
    assert out.shape == (S, B, E + D), out.shape
    assert jnp.allclose(out, ref, atol=1e-5, rtol=1e-5), "mismatch vs reference"
    print("KERNEL_OK")
</pallas_src>

<mosaic_0001>
module attributes {stable_mosaic.version = 11 : i64} {
  func.func @_concat_encoder_kernel(%arg0: i32, %arg1: memref<8x128xf32, #tpu.memory_space<vmem>>, %arg2: memref<8x10xf32, #tpu.memory_space<vmem>>, %arg3: memref<8x138xf32, #tpu.memory_space<vmem>>) attributes {dimension_semantics = [#tpu.dimension_semantics<parallel>], iteration_bounds = array<i64: 2>, scalar_prefetch = 0 : i64, scratch_operands = 0 : i64, tpu.core_type = #tpu.core_type<tc>, window_params = [{transform_indices = @transform_0, window_bounds = array<i64: 8, 128>}, {pipeline_mode = #tpu.pipeline_mode<synchronous>, transform_indices = @transform_1, window_bounds = array<i64: 8, 10>}, {transform_indices = @transform_2, window_bounds = array<i64: 8, 138>}]} {
    %c0 = arith.constant 0 : index
    %c0_0 = arith.constant 0 : index
    %0 = vector.load %arg1[%c0, %c0_0] : memref<8x128xf32, #tpu.memory_space<vmem>>, vector<8x128xf32>
    %c0_1 = arith.constant 0 : index
    %c0_2 = arith.constant 0 : index
    %1 = vector.load %arg3[%c0_1, %c0_2] : memref<8x138xf32, #tpu.memory_space<vmem>>, vector<8x128xf32>
    tpu.vector_store %arg3[%c0_1, %c0_2], %0 {strides = array<i32>} : memref<8x138xf32, #tpu.memory_space<vmem>>, vector<8x128xf32>,
    %c0_3 = arith.constant 0 : index
    %c0_4 = arith.constant 0 : index
    %2 = vector.load %arg2[%c0_3, %c0_4] : memref<8x10xf32, #tpu.memory_space<vmem>>, vector<8x10xf32>
    %c0_5 = arith.constant 0 : index
    %c128 = arith.constant 128 : index
    %3 = vector.load %arg3[%c0_5, %c128] : memref<8x138xf32, #tpu.memory_space<vmem>>, vector<8x10xf32>
    tpu.vector_store %arg3[%c0_5, %c128], %2 {strides = array<i32>} : memref<8x138xf32, #tpu.memory_space<vmem>>, vector<8x10xf32>,
    return
  }
  func.func @transform_0(%arg0: i32) -> (i32, i32) {
    %c0_i32 = arith.constant 0 : i32
    %c0_i32_0 = arith.constant 0 : i32
    return %arg0, %c0_i32 : i32, i32
  }
  func.func @transform_1(%arg0: i32) -> (i32, i32) {
    %c0_i32 = arith.constant 0 : i32
    %c0_i32_0 = arith.constant 0 : i32
    %c0_i32_1 = arith.constant 0 : i32
    return %c0_i32, %c0_i32_0 : i32, i32
  }
  func.func @transform_2(%arg0: i32) -> (i32, i32) {
    %c0_i32 = arith.constant 0 : i32
    %c0_i32_0 = arith.constant 0 : i32
    return %arg0, %c0_i32 : i32, i32
  }
}

</mosaic_0001>

<llo_original>
// kernel: tpu_custom_call.1
$region0: #{tpu_custom_call.1}
  #allocation0 [shape = 'u32[]', space=smem, size = 0x4, offset = 0x4, fixed_abs, tag = 'smem constant byte address 0x4 - core index']
  #allocation1 [shape = 'u32[144,128]{1,0:T(1,128)}', space=vmem, size = 0x12000, scoped, tag = 'internal scratch']
  %s0 = inlined_call_operand.hbm [shape: f32[16,128], index: 0, kind: input, shape index: {}]
  %s1 = inlined_call_operand.hbm [shape: f32[8,10], index: 1, kind: input, shape index: {}]
  %s2 = inlined_call_operand.hbm [shape: f32[16,138], index: 2, kind: output, shape index: {}]
  %s3 = sld [smem:[#allocation0]]
  $region49: #{tpu_custom_call.1} parent=0
    _
  %s5 = ssub.s32 1, %s3
  %s6 = scalar_select 0, %s5, %s3
  $region1: #{tpu_custom_call.1} parent=0
    #allocation2 [shape = 'u8[8192]{0}', space=vmem, size = 0x2000, scoped, tag = 'input window, operand 0']
    #allocation3 [shape = 's32[2]{0}', space=sflag, size = 0x8, scoped, tag = 'scoped memory for tpu_custom_call.1']
    #allocation4 [shape = 's32[2]{0}', space=sflag, size = 0x8, scoped, tag = 'scoped memory for tpu_custom_call.1']
    #allocation5 [shape = 'u8[4096]{0}', space=vmem, size = 0x1000, scoped, tag = 'input window, operand 1, single buffered']
    #allocation6 [shape = 's32[1]{0}', space=sflag, size = 0x4, scoped, tag = 'scoped memory for tpu_custom_call.1']
    #allocation7 [shape = 'u8[16384]{0}', space=vmem, size = 0x4000, scoped, tag = 'output window, operand 0']
    %7 = vsyncpa [#allocation3], 0
    %s8 = scalar_lea.sflag [#allocation3], 1
    %9 = vsyncpa %s8, 0
    %10 = vsyncpa [#allocation6], 0
    %11 = vsyncpa [#allocation4], 0
    %s12 = scalar_lea.sflag [#allocation4], 1
    %13 = vsyncpa %s12, 0
    loop: start=0, step=1, limit=4
    $region2: #{tpu_custom_call.1} parent=1 // loop_pre_header
      _
    $region3: #{tpu_custom_call.1} parent=1 // loop_header
      %s15 = sphi 0, %s19
      %p16 = scmp.ge.s32.totalorder %s15, 4
      %s25 = sphi 0, %s27
      %s28 = sphi 0, %s25
      %s29 = sphi 0, %s28
      %s45 = sphi 0, %s29
      %s49 = sphi 0, %s49
      %s51 = sphi 0, %s49
      %s52 = sphi 0, %s51
      %s66 = sphi 0, %s52
      %s72 = sphi 0, %s74
      %s75 = sphi 0, %s72
      %s76 = sphi 0, %s75
      %s92 = sphi 0, %s76
    $region4: #{tpu_custom_call.1} parent=1 // loop_header_branch
      %18 = sbr.rel (%p16) target = $region8
    $region5: #{tpu_custom_call.1} parent=1 // loop_body
      %s20 = ssub.s32 %s15, 1
      %s21 = ssub.s32 %s15, 2
      %s22 = sadd.s32 %s15, 1
      %s23 = ssub.s32 %s15, %s22
      %p24 = scmp.eq.s32.totalorder %s23, 0
      %s26 = sadd.s32 %s25, 1
      %s27 = scalar_select %p24, %s25, %s26
      %p30 = pneg %p24
      %p31 = scmp.eq.s32.totalorder %s15, 1
      %p32 = por %p30, %p31
      %p33 = scmp.ne.s32.totalorder %s25, %s28
      %p34 = scmp.eq.s32.totalorder %s15, 0
      %p35 = por %p33, %p34
      %p36 = scmp.ne.s32.totalorder %s25, %s28
      %p37 = scmp.eq.s32.totalorder %s20, 1
      %p38 = por %p36, %p37
      %p39 = scmp.ne.s32.totalorder %s28, %s29
      %p40 = scmp.eq.s32.totalorder %s20, 0
      %p41 = por %p39, %p40
      %p42 = scmp.ne.s32.totalorder %s28, %s29
      %p43 = scmp.eq.s32.totalorder %s21, 1
      %p44 = por %p42, %p43
      %p46 = scmp.ne.s32.totalorder %s29, %s45
      %p47 = scmp.eq.s32.totalorder %s21, 0
      %p48 = por %p46, %p47
      %s50 = sadd.s32 %s49, 1
      %p53 = scmp.eq.s32.totalorder %s15, 1
      %p54 = scmp.ne.s32.totalorder %s49, %s51
      %p55 = scmp.eq.s32.totalorder %s15, 0
      %p56 = por %p54, %p55
      %p57 = scmp.ne.s32.totalorder %s49, %s51
      %p58 = scmp.eq.s32.totalorder %s20, 1
      %p59 = por %p57, %p58
      %p60 = scmp.ne.s32.totalorder %s51, %s52
      %p61 = scmp.eq.s32.totalorder %s20, 0
      %p62 = por %p60, %p61
      %p63 = scmp.ne.s32.totalorder %s51, %s52
      %p64 = scmp.eq.s32.totalorder %s21, 1
      %p65 = por %p63, %p64
      %p67 = scmp.ne.s32.totalorder %s52, %s66
      %p68 = scmp.eq.s32.totalorder %s21, 0
      %p69 = por %p67, %p68
      %s70 = ssub.s32 %s15, %s22
      %p71 = scmp.eq.s32.totalorder %s70, 0
      %s73 = sadd.s32 %s72, 1
      %s74 = scalar_select %p71, %s72, %s73
      %p77 = pneg %p71
      %p78 = scmp.eq.s32.totalorder %s15, 1
      %p79 = por %p77, %p78
      %p80 = scmp.ne.s32.totalorder %s72, %s75
      %p81 = scmp.eq.s32.totalorder %s15, 0
      %p82 = por %p80, %p81
      %p83 = scmp.ne.s32.totalorder %s72, %s75
      %p84 = scmp.eq.s32.totalorder %s20, 1
      %p85 = por %p83, %p84
      %p86 = scmp.ne.s32.totalorder %s75, %s76
      %p87 = scmp.eq.s32.totalorder %s20, 0
      %p88 = por %p86, %p87
      %p89 = scmp.ne.s32.totalorder %s75, %s76
      %p90 = scmp.eq.s32.totalorder %s21, 1
      %p91 = por %p89, %p90
      %p93 = scmp.ne.s32.totalorder %s76, %s92
      %p94 = scmp.eq.s32.totalorder %s21, 0
      %p95 = por %p93, %p94
      %p96 = scmp.le.s32.totalorder 1, %s15
      %p97 = scmp.lt.s32.totalorder %s15, 3
      %p98 = pnand %p96, %p97
      %p99 = pneg %p98
      // Predicated region
      $region9: #{tpu_custom_call.1} parent=5 // pred_check
        _
      $region10: #{tpu_custom_call.1} parent=5 // pred_check_branch
        %101 = sbr.rel (%p98) target = $region12
      $region11: #{tpu_custom_call.1} parent=5 // pred_region
        %s102 = ssub.s32 %s15, 1
        // Predicated region
        $region13: #{tpu_custom_call.1} parent=11 // pred_check
          %p103 = pneg %p62
        $region14: #{tpu_custom_call.1} parent=11 // pred_check_branch
          %105 = sbr.rel (%p103) target = $region16
        $region15: #{tpu_custom_call.1} parent=11 // pred_region
          %s107 = ssub.s32 128, 128
          %108 = vsyncadd [#allocation6], %s107
          %s110 = sshll.u32 [#allocation5], 4
          %s111 = int_to_ptr.vmem [resolvable:$true] %s110
          %113 = dma.hbm_to_vmem [thread:$0]  %s1, 128, %s111, [#allocation6]
        $region16: #{tpu_custom_call.1} parent=11 // pred_fallthru
          _
      $region12: #{tpu_custom_call.1} parent=5 // pred_fallthru
        _
      %p114 = scmp.lt.s32.totalorder %s15, 2
      // Predicated region
      $region17: #{tpu_custom_call.1} parent=5 // pred_check
        %p115 = pneg %p114
      $region18: #{tpu_custom_call.1} parent=5 // pred_check_branch
        %117 = sbr.rel (%p115) target = $region20
      $region19: #{tpu_custom_call.1} parent=5 // pred_region
        // Predicated region
        $region21: #{tpu_custom_call.1} parent=19 // pred_check
          %p118 = pneg %p35
        $region22: #{tpu_custom_call.1} parent=19 // pred_check_branch
          %120 = sbr.rel (%p118) target = $region24
        $region23: #{tpu_custom_call.1} parent=19 // pred_region
          %s121 = sand.u32 %s25, 1
          %s122 = scalar_lea.sflag [#allocation3], %s121
          %s123 = sand.u32 %s25, 1
          %s124 = smul.addr %s123, 8
          %s125 = scalar_lea.vmem [#allocation2], %s124
          %s127 = ssub.s32 128, 128
          %128 = vsyncadd %s122, %s127
          %s129 = smul.addr %s15, 128
          %s130 = scalar_lea.hbm %s0, %s129
          %s132 = sshll.u32 %s125, 4
          %s133 = int_to_ptr.vmem [resolvable:$true] %s132
          %135 = dma.hbm_to_vmem [thread:$0]  %s130, 128, %s133, %s122
        $region24: #{tpu_custom_call.1} parent=19 // pred_fallthru
          _
      $region20: #{tpu_custom_call.1} parent=5 // pred_fallthru
        _
      %p136 = scmp.le.s32.totalorder 1, %s15
      %p137 = scmp.lt.s32.totalorder %s15, 3
      %p138 = pnand %p136, %p137
      %p139 = pneg %p138
      // Predicated region
      $region25: #{tpu_custom_call.1} parent=5 // pred_check
        _
      $region26: #{tpu_custom_call.1} parent=5 // pred_check_branch
        %141 = sbr.rel (%p138) target = $region28
      $region27: #{tpu_custom_call.1} parent=5 // pred_region
        %s142 = ssub.s32 %s15, 1
        %s143 = sand.u32 %s28, 1
        %s144 = scalar_lea.sflag [#allocation3], %s143
        %s145 = sand.u32 %s28, 1
        %s146 = smul.addr %s145, 8
        %s147 = scalar_lea.vmem [#allocation2], %s146
        // Predicated region
        $region29: #{tpu_custom_call.1} parent=27 // pred_check
          %p148 = pneg %p41
        $region30: #{tpu_custom_call.1} parent=27 // pred_check_branch
          %150 = sbr.rel (%p148) target = $region32
        $region31: #{tpu_custom_call.1} parent=27 // pred_region
          %151 = dma.done %s144, 128
        $region32: #{tpu_custom_call.1} parent=27 // pred_fallthru
          _
        // Predicated region
        $region33: #{tpu_custom_call.1} parent=27 // pred_check
          %p152 = pneg %p62
        $region34: #{tpu_custom_call.1} parent=27 // pred_check_branch
          %154 = sbr.rel (%p152) target = $region36
        $region35: #{tpu_custom_call.1} parent=27 // pred_region
          %155 = dma.done [#allocation6], 128
        $region36: #{tpu_custom_call.1} parent=27 // pred_fallthru
          _
        %s156 = sand.u32 %s28, 1
        %s157 = scalar_lea.sflag [#allocation3], %s156
        %s158 = sand.u32 %s28, 1
        %s159 = smul.addr %s158, 8
        %s160 = scalar_lea.vmem [#allocation2], %s159
        %p161 = pneg %p41
        %p162 = pneg %p38
        %p163 = pneg %p62
        %p164 = pneg %p59
        %p165 = pneg %p88
        %p166 = pneg %p85
        %s167 = sand.u32 %s75, 1
        %s168 = scalar_lea.sflag [#allocation4], %s167
        %s169 = sand.u32 %s75, 1
        %s170 = smul.addr %s169, 16
        %s171 = scalar_lea.vmem [#allocation7], %s170
        %v172 = vld [vmem:[%s147] sm:$0xff]
        %173 = vst [vmem:[%s171] sm:$0xff] %v172
        %v174 = vld [vmem:[#allocation5] sm:$0xff]
        %vm175 = vcmask 80896
        %176 = vst.msk [vmem:[%s171 + $0x8] sm:$0xff] %vm175, %v174
        %s177 = sand.u32 %s75, 1
        %s178 = scalar_lea.sflag [#allocation4], %s177
        %s179 = sand.u32 %s75, 1
        %s180 = smul.addr %s179, 16
        %s181 = scalar_lea.vmem [#allocation7], %s180
        // Predicated region
        $region37: #{tpu_custom_call.1} parent=27 // pred_check
          %p182 = pneg %p85
        $region38: #{tpu_custom_call.1} parent=27 // pred_check_branch
          %184 = sbr.rel (%p182) target = $region40
        $region39: #{tpu_custom_call.1} parent=27 // pred_region
          %s186 = ssub.s32 256, 256
          %187 = vsyncadd %s178, %s186
          %s188 = smul.addr %s20, 2
          %s189 = smul.addr %s188, 128
          %s190 = scalar_lea.hbm %s2, %s189
          %s192 = sshll.u32 %s181, 4
          %s193 = int_to_ptr.vmem [resolvable:$true] %s192
          %195 = dma.vmem_to_hbm [thread:$0]  %s193, 256, %s190, %s178
        $region40: #{tpu_custom_call.1} parent=27 // pred_fallthru
          _
      $region28: #{tpu_custom_call.1} parent=5 // pred_fallthru
        _
      %p196 = scmp.le.s32.totalorder 2, %s15
      // Predicated region
      $region41: #{tpu_custom_call.1} parent=5 // pred_check
        %p197 = pneg %p196
      $region42: #{tpu_custom_call.1} parent=5 // pred_check_branch
        %199 = sbr.rel (%p197) target = $region44
      $region43: #{tpu_custom_call.1} parent=5 // pred_region
        %s200 = ssub.s32 %s15, 2
        // Predicated region
        $region45: #{tpu_custom_call.1} parent=43 // pred_check
          %p201 = pneg %p91
        $region46: #{tpu_custom_call.1} parent=43 // pred_check_branch
          %203 = sbr.rel (%p201) target = $region48
        $region47: #{tpu_custom_call.1} parent=43 // pred_region
          %s204 = sand.u32 %s76, 1
          %s205 = scalar_lea.sflag [#allocation4], %s204
          %s206 = sand.u32 %s76, 1
          %s207 = smul.addr %s206, 16
          %s208 = scalar_lea.vmem [#allocation7], %s207
          %209 = dma.done %s205, 256
        $region48: #{tpu_custom_call.1} parent=43 // pred_fallthru
          _
      $region44: #{tpu_custom_call.1} parent=5 // pred_fallthru
        _
    $region6: #{tpu_custom_call.1} parent=1 // loop_footer
      %s19 = sadd.s32 1, %s15
    $region7: #{tpu_custom_call.1} parent=1 // loop_footer_branch
      %14 = sbr.rel target = $region3
    $region8: #{tpu_custom_call.1} parent=1 // loop_exit
      _
    %210 = vsyncpa [#allocation3], 1
    %s211 = scalar_lea.sflag [#allocation3], 1
    %212 = vsyncpa %s211, 1
    %213 = vsyncpa [#allocation6], 1
    %214 = vsyncpa [#allocation4], 1
    %s215 = scalar_lea.sflag [#allocation4], 1
    %216 = vsyncpa %s215, 1

</llo_original>
